<compile_context>
chip_gen: v7x
topology: tpu7x:2x2x1
jax: 0.10.0
libtpu: 0.0.40
codegen_flags: <defaults>
</compile_context>

<pallas_src>
import functools

import jax
import jax.numpy as jnp
from jax.experimental import pallas as pl
from jax.experimental.pallas import tpu as pltpu


def center_loss_kernel(x_ref, w_ref, ct_ref, label_ref, out_ref, loss_ref, *,
                       num_classes, inv_b, lamda):
    x = x_ref[...].astype(jnp.float32)        # (B, D)
    w = w_ref[...].astype(jnp.float32)        # (D, Cp)  zero beyond num_classes
    ct = ct_ref[...].astype(jnp.float32)      # (D, Cp)  center^T, zero-padded
    label = label_ref[...]                    # (B, 1) int32

    B, D = x.shape
    Cp = w.shape[1]

    # One-hot of `label`, built on the VPU (no host-side one_hot / extra DMA).
    lane = jax.lax.broadcasted_iota(jnp.int32, (B, Cp), 1)      # (B, Cp)
    onehot = (lane == label).astype(jnp.float32)                # zero on padded lanes
    valid = lane < num_classes                                  # (B, Cp) bool

    # out = x.mm(weight) with K = D (tiny): broadcast-mul + add on the VPU.
    # ncenter = center.index_select(0, label): masked lane reduction per feature.
    out = jnp.zeros((B, Cp), jnp.float32)
    sq = jnp.zeros((B, 1), jnp.float32)
    for d in range(D):                                          # D is tiny & static
        x_d = x[:, d:d + 1]                                     # (B, 1)
        out = out + x_d * w[d:d + 1, :]                         # (B, Cp)
        nc_d = jnp.sum(onehot * ct[d:d + 1, :], axis=-1,
                       keepdims=True)                           # (B, 1) gathered center col
        diff = x_d - nc_d
        sq = sq + diff * diff

    out_ref[...] = out.astype(out_ref.dtype)                    # lane-dense full-vreg store

    # centerloss = 0.5 / B * x.dist(ncenter)   (torch.dist == global L2 norm)
    distance = jnp.sqrt(jnp.sum(sq))
    centerloss = 0.5 * inv_b * distance

    # celoss = F.cross_entropy(out, label), mean reduction, padded lanes masked.
    out_m = jnp.where(valid, out, jnp.float32(-1e30))
    m = jnp.max(out_m, axis=-1, keepdims=True)                  # (B, 1)
    lse = m + jnp.log(jnp.sum(jnp.exp(out_m - m), axis=-1, keepdims=True))
    picked = jnp.sum(onehot * out, axis=-1, keepdims=True)      # (B, 1)
    celoss = jnp.sum(lse - picked) * inv_b

    # Scalar result goes straight to SMEM (no vreg->VMEM->HBM round trip).
    loss_ref[0, 0] = celoss + lamda * centerloss


def center_loss_forward(x, label, weight, center, lamda=0.2):
    B, D = x.shape
    C = weight.shape[1]
    c_pad = ((C + 127) // 128) * 128           # lane-dense logits slab

    w_pad = jnp.zeros((D, c_pad), jnp.float32).at[:, :C].set(
        weight.astype(jnp.float32))
    ct_pad = jnp.zeros((D, c_pad), jnp.float32).at[:, :C].set(
        center.astype(jnp.float32).T)
    label2d = label.astype(jnp.int32).reshape(B, 1)

    kernel = functools.partial(center_loss_kernel, num_classes=C,
                               inv_b=1.0 / float(B), lamda=float(lamda))

    out_pad, loss = pl.pallas_call(
        kernel,
        out_shape=(jax.ShapeDtypeStruct((B, c_pad), jnp.float32),
                   jax.ShapeDtypeStruct((1, 1), jnp.float32)),
        in_specs=[
            pl.BlockSpec(memory_space=pltpu.MemorySpace.VMEM),   # x        (B, D)
            pl.BlockSpec(memory_space=pltpu.MemorySpace.VMEM),   # weight   (D, Cp)
            pl.BlockSpec(memory_space=pltpu.MemorySpace.VMEM),   # center^T (D, Cp)
            pl.BlockSpec(memory_space=pltpu.MemorySpace.VMEM),   # label    (B, 1) i32
        ],
        out_specs=(
            pl.BlockSpec(memory_space=pltpu.MemorySpace.VMEM),   # logits   (B, Cp)
            pl.BlockSpec(memory_space=pltpu.MemorySpace.SMEM),   # scalar loss
        ),
    )(x.astype(jnp.float32), w_pad, ct_pad, label2d)

    # Wrapper slices the lane-dense slab back to the module's (B, C) logits.
    return out_pad[:, :C], loss[0, 0]


def init_params(key):
    """Deterministic parameter init mirroring CenterLoss.__init__ shapes."""
    k_center, k_weight = jax.random.split(key)
    # self.center = nn.Parameter(10 * torch.randn(10, 2))
    center = 10.0 * jax.random.normal(k_center, (10, 2), dtype=jnp.float32)
    # self.weight = nn.Parameter(torch.Tensor(2, 10)); xavier_uniform_
    fan_in, fan_out = 10, 2   # PyTorch: fan_in=size(1), fan_out=size(0) for 2-D
    bound = (6.0 / (fan_in + fan_out)) ** 0.5
    weight = jax.random.uniform(k_weight, (2, 10), dtype=jnp.float32,
                                minval=-bound, maxval=bound)
    return weight, center


if __name__ == "__main__":
    key = jax.random.PRNGKey(0)
    k_params, k_x, k_label = jax.random.split(key, 3)

    weight, center = init_params(k_params)

    B = 8                                # small batch, feature dim = 2, 10 classes
    x = jax.random.normal(k_x, (B, 2), dtype=jnp.float32)
    label = jax.random.randint(k_label, (B,), 0, 10, dtype=jnp.int32)

    out, loss = center_loss_forward(x, label, weight, center, lamda=0.2)
    jax.block_until_ready((out, loss))

    assert out.shape == (B, 10)
    assert loss.shape == ()
    assert bool(jnp.isfinite(loss))
    print("KERNEL_OK")
</pallas_src>

<mosaic_0001>
module attributes {stable_mosaic.version = 11 : i64} {
  func.func @center_loss_kernel(%arg0: memref<8x2xf32, #tpu.memory_space<vmem>>, %arg1: memref<2x128xf32, #tpu.memory_space<vmem>>, %arg2: memref<2x128xf32, #tpu.memory_space<vmem>>, %arg3: memref<8x1xi32, #tpu.memory_space<vmem>>, %arg4: memref<8x128xf32, #tpu.memory_space<vmem>>, %arg5: memref<1x1xf32, #tpu.memory_space<smem>>) attributes {dimension_semantics = [], scalar_prefetch = 0 : i64, scratch_operands = 0 : i64, tpu.core_type = #tpu.core_type<tc>} {
    %c0 = arith.constant 0 : index
    %c0_0 = arith.constant 0 : index
    %0 = vector.load %arg0[%c0, %c0_0] : memref<8x2xf32, #tpu.memory_space<vmem>>, vector<8x2xf32>
    %c0_1 = arith.constant 0 : index
    %c0_2 = arith.constant 0 : index
    %1 = vector.load %arg1[%c0_1, %c0_2] : memref<2x128xf32, #tpu.memory_space<vmem>>, vector<2x128xf32>
    %c0_3 = arith.constant 0 : index
    %c0_4 = arith.constant 0 : index
    %2 = vector.load %arg2[%c0_3, %c0_4] : memref<2x128xf32, #tpu.memory_space<vmem>>, vector<2x128xf32>
    %c0_5 = arith.constant 0 : index
    %c0_6 = arith.constant 0 : index
    %3 = vector.load %arg3[%c0_5, %c0_6] : memref<8x1xi32, #tpu.memory_space<vmem>>, vector<8x1xi32>
    %4 = tpu.iota {dimensions = array<i32: 1>} : vector<8x128xi32>
    %5 = vector.broadcast %3 : vector<8x1xi32> to vector<8x128xi32>
    %6 = arith.cmpi eq, %4, %5 : vector<8x128xi32>
    %7 = arith.extui %6 : vector<8x128xi1> to vector<8x128xi32>
    %8 = arith.sitofp %7 : vector<8x128xi32> to vector<8x128xf32>
    %c10_i32 = arith.constant 10 : i32
    %9 = vector.broadcast %c10_i32 : i32 to vector<8x128xi32>
    %10 = arith.cmpi slt, %4, %9 : vector<8x128xi32>
    %cst = arith.constant 0.000000e+00 : f32
    %11 = vector.broadcast %cst : f32 to vector<8x128xf32>
    %cst_7 = arith.constant 0.000000e+00 : f32
    %12 = vector.broadcast %cst_7 : f32 to vector<8x1xf32>
    %13 = vector.extract_strided_slice %0 {offsets = [0, 0], sizes = [8, 1], strides = [1, 1]} : vector<8x2xf32> to vector<8x1xf32>
    %14 = vector.extract_strided_slice %1 {offsets = [0, 0], sizes = [1, 128], strides = [1, 1]} : vector<2x128xf32> to vector<1x128xf32>
    %15 = vector.broadcast %13 : vector<8x1xf32> to vector<8x128xf32>
    %16 = vector.broadcast %14 : vector<1x128xf32> to vector<8x128xf32>
    %17 = arith.mulf %15, %16 : vector<8x128xf32>
    %18 = arith.addf %11, %17 : vector<8x128xf32>
    %19 = vector.extract_strided_slice %2 {offsets = [0, 0], sizes = [1, 128], strides = [1, 1]} : vector<2x128xf32> to vector<1x128xf32>
    %20 = vector.broadcast %19 : vector<1x128xf32> to vector<8x128xf32>
    %21 = arith.mulf %8, %20 : vector<8x128xf32>
    %cst_8 = arith.constant dense<0.000000e+00> : vector<8xf32>
    %22 = vector.multi_reduction <add>, %21, %cst_8 [1] : vector<8x128xf32> to vector<8xf32>
    %23 = vector.shape_cast %22 : vector<8xf32> to vector<8x1xf32>
    %24 = arith.subf %13, %23 : vector<8x1xf32>
    %25 = arith.mulf %24, %24 : vector<8x1xf32>
    %26 = arith.addf %12, %25 : vector<8x1xf32>
    %27 = vector.extract_strided_slice %0 {offsets = [0, 1], sizes = [8, 1], strides = [1, 1]} : vector<8x2xf32> to vector<8x1xf32>
    %28 = vector.extract_strided_slice %1 {offsets = [1, 0], sizes = [1, 128], strides = [1, 1]} : vector<2x128xf32> to vector<1x128xf32>
    %29 = vector.broadcast %27 : vector<8x1xf32> to vector<8x128xf32>
    %30 = vector.broadcast %28 : vector<1x128xf32> to vector<8x128xf32>
    %31 = arith.mulf %29, %30 : vector<8x128xf32>
    %32 = arith.addf %18, %31 : vector<8x128xf32>
    %33 = vector.extract_strided_slice %2 {offsets = [1, 0], sizes = [1, 128], strides = [1, 1]} : vector<2x128xf32> to vector<1x128xf32>
    %34 = vector.broadcast %33 : vector<1x128xf32> to vector<8x128xf32>
    %35 = arith.mulf %8, %34 : vector<8x128xf32>
    %cst_9 = arith.constant dense<0.000000e+00> : vector<8xf32>
    %36 = vector.multi_reduction <add>, %35, %cst_9 [1] : vector<8x128xf32> to vector<8xf32>
    %37 = vector.shape_cast %36 : vector<8xf32> to vector<8x1xf32>
    %38 = arith.subf %27, %37 : vector<8x1xf32>
    %39 = arith.mulf %38, %38 : vector<8x1xf32>
    %40 = arith.addf %26, %39 : vector<8x1xf32>
    %c0_10 = arith.constant 0 : index
    %c0_11 = arith.constant 0 : index
    %41 = vector.load %arg4[%c0_10, %c0_11] : memref<8x128xf32, #tpu.memory_space<vmem>>, vector<8x128xf32>
    tpu.vector_store %arg4[%c0_10, %c0_11], %32 {strides = array<i32>} : memref<8x128xf32, #tpu.memory_space<vmem>>, vector<8x128xf32>,
    %42 = vector.shape_cast %40 : vector<8x1xf32> to vector<1x8x1xf32>
    %cst_12 = arith.constant dense<0.000000e+00> : vector<1xf32>
    %43 = vector.multi_reduction <add>, %42, %cst_12 [1, 2] : vector<1x8x1xf32> to vector<1xf32>
    %44 = vector.shape_cast %43 : vector<1xf32> to vector<1x1x1xf32>
    %45 = vector.extract %44[0, 0, 0] : f32 from vector<1x1x1xf32>
    %46 = math.sqrt %45 : f32
    %cst_13 = arith.constant 6.250000e-02 : f32
    %47 = arith.mulf %cst_13, %46 : f32
    %cst_14 = arith.constant -1.000000e+30 : f32
    %48 = vector.broadcast %cst_14 : f32 to vector<8x128xf32>
    %49 = arith.select %10, %32, %48 : vector<8x128xi1>, vector<8x128xf32>
    %cst_15 = arith.constant dense<0xFF800000> : vector<8xf32>
    %50 = vector.multi_reduction <maximumf>, %49, %cst_15 [1] : vector<8x128xf32> to vector<8xf32>
    %51 = vector.shape_cast %50 : vector<8xf32> to vector<8x1xf32>
    %52 = vector.broadcast %51 : vector<8x1xf32> to vector<8x128xf32>
    %53 = arith.subf %49, %52 : vector<8x128xf32>
    %54 = math.exp %53 : vector<8x128xf32>
    %cst_16 = arith.constant dense<0.000000e+00> : vector<8xf32>
    %55 = vector.multi_reduction <add>, %54, %cst_16 [1] : vector<8x128xf32> to vector<8xf32>
    %56 = vector.shape_cast %55 : vector<8xf32> to vector<8x1xf32>
    %57 = math.log %56 : vector<8x1xf32>
    %58 = arith.addf %51, %57 : vector<8x1xf32>
    %59 = arith.mulf %8, %32 : vector<8x128xf32>
    %cst_17 = arith.constant dense<0.000000e+00> : vector<8xf32>
    %60 = vector.multi_reduction <add>, %59, %cst_17 [1] : vector<8x128xf32> to vector<8xf32>
    %61 = vector.shape_cast %60 : vector<8xf32> to vector<8x1xf32>
    %62 = arith.subf %58, %61 : vector<8x1xf32>
    %63 = vector.shape_cast %62 : vector<8x1xf32> to vector<1x8x1xf32>
    %cst_18 = arith.constant dense<0.000000e+00> : vector<1xf32>
    %64 = vector.multi_reduction <add>, %63, %cst_18 [1, 2] : vector<1x8x1xf32> to vector<1xf32>
    %65 = vector.shape_cast %64 : vector<1xf32> to vector<1x1x1xf32>
    %66 = vector.extract %65[0, 0, 0] : f32 from vector<1x1x1xf32>
    %cst_19 = arith.constant 1.250000e-01 : f32
    %67 = arith.mulf %66, %cst_19 : f32
    %cst_20 = arith.constant 2.000000e-01 : f32
    %68 = arith.mulf %cst_20, %47 : f32
    %69 = arith.addf %67, %68 : f32
    %c0_21 = arith.constant 0 : index
    %c0_22 = arith.constant 0 : index
    %70 = memref.load %arg5[%c0_21, %c0_22] : memref<1x1xf32, #tpu.memory_space<smem>>
    memref.store %69, %arg5[%c0_21, %c0_22] : memref<1x1xf32, #tpu.memory_space<smem>>
    return
  }
}

</mosaic_0001>

<llo_original>
// kernel: tpu_custom_call.1
$region0: #{tpu_custom_call.1}
  #allocation0 [shape = 'u32[]', space=smem, size = 0x4, offset = 0x4, fixed_abs, tag = 'smem constant byte address 0x4 - core index']
  #allocation1 [shape = 'u32[144,128]{1,0:T(1,128)}', space=vmem, size = 0x12000, scoped, tag = 'internal scratch']
  %s0 = inlined_call_operand.vmem [shape: f32[8,2], index: 0, kind: input, shape index: {}]
  %s1 = inlined_call_operand.vmem [shape: f32[2,128], index: 1, kind: input, shape index: {}]
  %s2 = inlined_call_operand.vmem [shape: f32[2,128], index: 2, kind: input, shape index: {}]
  %s3 = inlined_call_operand.vmem [shape: s32[8,1], index: 3, kind: input, shape index: {}]
  %s4 = inlined_call_operand.hbm [shape: f32[8,128], index: 4, kind: output, shape index: {0}]
  %s5 = inlined_call_operand.hbm [shape: f32[1,1], index: 5, kind: output, shape index: {1}]
  %6 = xla_tuple %s4, %s5
  %s7 = sld [smem:[#allocation0]]
  $region34: #{tpu_custom_call.1} parent=0
    _
  %s9 = ssub.s32 1, %s7
  %s10 = scalar_select 0, %s9, %s7
  $region1: #{tpu_custom_call.1} parent=0
    #allocation2 [shape = 'u8[4096]{0}', space=vmem, size = 0x1000, scoped, tag = 'output window, operand 0, single buffered']
    #allocation3 [shape = 's32[1]{0}', space=sflag, size = 0x4, scoped, tag = 'scoped memory for tpu_custom_call.1']
    #allocation4 [shape = 's32[1]{0}', space=sflag, size = 0x4, scoped, tag = 'scoped memory for tpu_custom_call.1']
    #allocation5 [shape = 'u8[512]{0}', space=smem, size = 0x200, scoped, tag = 'output window, operand 1, single buffered']
    %11 = vsyncpa [#allocation3], 0
    %12 = vsyncpa [#allocation4], 0
    // Predicated region
    $region2: #{tpu_custom_call.1} parent=1 // pred_check
      _
    $region3: #{tpu_custom_call.1} parent=1 // pred_check_branch
      %14 = sbr.rel (0) target = $region5
    $region4: #{tpu_custom_call.1} parent=1 // pred_region
      _
    $region5: #{tpu_custom_call.1} parent=1 // pred_fallthru
      _
    // Predicated region
    $region6: #{tpu_custom_call.1} parent=1 // pred_check
      _
    $region7: #{tpu_custom_call.1} parent=1 // pred_check_branch
      %16 = sbr.rel (0) target = $region9
    $region8: #{tpu_custom_call.1} parent=1 // pred_region
      _
    $region9: #{tpu_custom_call.1} parent=1 // pred_fallthru
      _
    // Predicated region
    $region10: #{tpu_custom_call.1} parent=1 // pred_check
      _
    $region11: #{tpu_custom_call.1} parent=1 // pred_check_branch
      %18 = sbr.rel (0) target = $region13
    $region12: #{tpu_custom_call.1} parent=1 // pred_region
      _
    $region13: #{tpu_custom_call.1} parent=1 // pred_fallthru
      _
    // Predicated region
    $region14: #{tpu_custom_call.1} parent=1 // pred_check
      _
    $region15: #{tpu_custom_call.1} parent=1 // pred_check_branch
      %20 = sbr.rel (0) target = $region17
    $region16: #{tpu_custom_call.1} parent=1 // pred_region
      _
    $region17: #{tpu_custom_call.1} parent=1 // pred_fallthru
      _
    %v21 = vld [vmem:[%s0] sm:$0xff]
    %v22 = vld [vmem:[%s1] sm:$0x3]
    %v23 = vld [vmem:[%s2] sm:$0x3]
    %v24 = vld [vmem:[%s3] sm:$0xff]
    %v25 = vlaneseq
    %v26 = vand.u32 %v25, 127
    %27 = vset.pattern.permute.xlu0 0
    %28 = vperm.xlu0 %27, %v24
    %v29 = vpop.permute.xlu0 %28
    %vm30 = vcmp.eq.s32.totalorder %v26, %v29
    %v31 = vsel %vm30, 1, 0
    %v32 = vcvt.s32.f32 %v31
    %vm33 = vcmp.lt.s32.totalorder %v26, 10
    %35 = vset.pattern.permute.xlu0 0
    %36 = vperm.xlu0 %35, %v21
    %v37 = vpop.permute.xlu0 %36
    %v39 = vlaneseq
    %v40 = vshrl.u32 %v39, 7
    %v41 = vsub.s32 0, %v40
    %v42 = vrot.slane %v22, %v41
    %v43 = vmul.f32 %v37, %v42
    %v44 = vadd.f32 %v43, 0.0
    %v45 = vlaneseq
    %v46 = vshrl.u32 %v45, 7
    %v47 = vsub.s32 0, %v46
    %v48 = vrot.slane %v23, %v47
    %v49 = vmul.f32 %v32, %v48
    %50 = vadd.xlane.f32.xlu0 %v49
    %v51 = vpop.xlane.xlu0 %50
    %v52 = vsub.f32 %v21, %v51
    %v53 = vmul.f32 %v52, %v52
    %v54 = vadd.f32 %v53, 0.0
    %55 = vset.pattern.permute.xlu0 1
    %56 = vperm.xlu0 %55, %v21
    %v57 = vpop.permute.xlu0 %56
    %v59 = vlaneseq
    %v60 = vshrl.u32 %v59, 7
    %v61 = vsub.s32 1, %v60
    %v62 = vrot.slane %v22, %v61
    %v63 = vmul.f32 %v57, %v62
    %v64 = vadd.f32 %v44, %v63
    %v65 = vlaneseq
    %v66 = vshrl.u32 %v65, 7
    %v67 = vsub.s32 1, %v66
    %v68 = vrot.slane %v23, %v67
    %v69 = vmul.f32 %v32, %v68
    %70 = vadd.xlane.f32.xlu0 %v69
    %v71 = vpop.xlane.xlu0 %70
    %v72 = vsub.f32 %v21, %v71
    %v73 = vmul.f32 %v72, %v72
    %75 = vrot.lane.b32.xlu0 %v73, 127
    %v76 = vpop.permute.xlu0 %75
    %v78 = vadd.f32 %v54, %v76
    %79 = vst [vmem:[#allocation2] sm:$0xff] %v64
    %vm80 = vcmask 7168
    %v81 = vsel %vm80, %v78, 0.0
    %82 = vadd.xlane.f32.xlu0 %v81
    %v83 = vpop.xlane.xlu0 %82
    %v84 = vrot.slane %v83, 4
    %v85 = vadd.f32 %v83, %v84
    %v86 = vrot.slane %v85, 2
    %v87 = vadd.f32 %v85, %v86
    %v88 = vrot.slane %v87, 1
    %v89 = vadd.f32 %v87, %v88
    %s90 = vtos %v89
    %v91 = vstv %s90
    %v92 = vrsqrt.pop %v91
    %v93 = vmul.f32 %v91, %v92
    %vm94 = vcmp.eq.f32.partialorder %v91, inf
    %v95 = vsel %vm94, %v91, %v93
    %vm96 = vcmp.eq.f32.partialorder %v91, 0.0
    %v97 = vand.u32 %v91, 2147483648
    %v98 = vsel %vm96, %v97, %v95
    %s99 = vtos %v98
    %s100 = smul.f32 %s99, 0.0625
    %v101 = vsel %vm33, %v64, -1e+30
    %102 = vmax.xlane.f32.xlu0 %v101
    %v103 = vpop.xlane.xlu0 %102
    %v104 = vsub.f32 %v101, %v103
    %v105 = vmul.f32 %v104, 1.442695
    %v106 = vpow.pop %v105
    %107 = vadd.xlane.f32.xlu0 %v106
    %v108 = vpop.xlane.xlu0 %107
    %v109 = vlog2.pop %v108
    %v110 = vmul.f32 %v109, 0.6931472
    %v111 = vadd.f32 %v103, %v110
    %v112 = vmul.f32 %v32, %v64
    %113 = vadd.xlane.f32.xlu0 %v112
    %v114 = vpop.xlane.xlu0 %113
    %v115 = vsub.f32 %v111, %v114
    %v116 = vsel %vm80, %v115, 0.0
    %117 = vadd.xlane.f32.xlu0 %v116
    %v118 = vpop.xlane.xlu0 %117
    %v119 = vrot.slane %v118, 4
    %v120 = vadd.f32 %v118, %v119
    %v121 = vrot.slane %v120, 2
    %v122 = vadd.f32 %v120, %v121
    %v123 = vrot.slane %v122, 1
    %v124 = vadd.f32 %v122, %v123
    %s125 = vtos %v124
    %s126 = smul.f32 %s125, 0.125
    %s127 = smul.f32 %s100, 0.2
    %s128 = sadd.f32 %s126, %s127
    %s129 = scalar_lea.smem [#allocation5], 0
    %130 = sst [smem:[%s129]] %s128
    // Predicated region
    $region18: #{tpu_custom_call.1} parent=1 // pred_check
      _
    $region19: #{tpu_custom_call.1} parent=1 // pred_check_branch
      %132 = sbr.rel (0) target = $region21
    $region20: #{tpu_custom_call.1} parent=1 // pred_region
      %s134 = ssub.s32 128, 128
      %135 = vsyncadd [#allocation3], %s134
      %s137 = sshll.u32 [#allocation2], 4
      %s138 = int_to_ptr.vmem [resolvable:$true] %s137
      %140 = dma.vmem_to_hbm [thread:$0]  %s138, 128, %s4, [#allocation3]
    $region21: #{tpu_custom_call.1} parent=1 // pred_fallthru
      _
    // Predicated region
    $region22: #{tpu_custom_call.1} parent=1 // pred_check
      _
    $region23: #{tpu_custom_call.1} parent=1 // pred_check_branch
      %142 = sbr.rel (0) target = $region25
    $region24: #{tpu_custom_call.1} parent=1 // pred_region
      %s144 = ssub.s32 16, 16
      %145 = vsyncadd [#allocation4], %s144
      %148 = dma.smem_to_hbm [#allocation5], 16, %s5, [#allocation4]
    $region25: #{tpu_custom_call.1} parent=1 // pred_fallthru
      _
    // Predicated region
    $region26: #{tpu_custom_call.1} parent=1 // pred_check
      _
    $region27: #{tpu_custom_call.1} parent=1 // pred_check_branch
      %150 = sbr.rel (0) target = $region29
    $region28: #{tpu_custom_call.1} parent=1 // pred_region
      %151 = dma.done [#allocation3], 128
    $region29: #{tpu_custom_call.1} parent=1 // pred_fallthru
      _
    // Predicated region
    $region30: #{tpu_custom_call.1} parent=1 // pred_check
      _
    $region31: #{tpu_custom_call.1} parent=1 // pred_check_branch
      %153 = sbr.rel (0) target = $region33
    $region32: #{tpu_custom_call.1} parent=1 // pred_region
      %154 = dma.done [#allocation4], 16
    $region33: #{tpu_custom_call.1} parent=1 // pred_fallthru
      _
    %155 = sfence
    %156 = vsyncpa [#allocation3], 1
    %157 = vsyncpa [#allocation4], 1

</llo_original>
